<compile_context>
chip_gen: v7x
topology: tpu7x:2x2x1
jax: 0.10.0
libtpu: 0.0.40
codegen_flags: <defaults>
</compile_context>

<pallas_src>
import functools

import jax
import jax.numpy as jnp
from jax.experimental import pallas as pl
from jax.experimental.pallas import tpu as pltpu


def _softplus_torch(x):
    # PyTorch nn.Softplus(beta=1, threshold=20): linear for x > 20.
    safe = jnp.minimum(x, 20.0)
    return jnp.where(x > 20.0, x, jnp.log1p(jnp.exp(safe)))


def _epilogue(loss, labels, out_ref, *, alpha, pos_weight, neg_weight, beta):
    # loss: (B, 1) f32 per-sample MSE; labels: (B, 1) int32.
    # weighted = beta*pos_w*pos_mask*loss - neg_w*neg_mask*loss
    #          = loss * (beta*pos_w*pos_mask - neg_w*neg_mask)
    pos_mask = (labels == 1).astype(jnp.float32)
    neg_mask = (labels == 0).astype(jnp.float32)
    coef = (beta * pos_weight) * pos_mask - neg_weight * neg_mask
    sp = _softplus_torch(alpha * (coef * loss))
    out_ref[...] = jnp.mean(sp).reshape(1, 1)


def _kernel_single(labels_ref, pred_ref, target_ref, out_ref, *,
                   feat_total, alpha, pos_weight, neg_weight, beta):
    # Whole feature range resident in one block: no accumulator scratch needed.
    diff = pred_ref[...].astype(jnp.float32) - target_ref[...].astype(jnp.float32)
    loss = jnp.sum(diff * diff, axis=1, keepdims=True) * (1.0 / feat_total)
    _epilogue(loss, labels_ref[...], out_ref, alpha=alpha, pos_weight=pos_weight,
              neg_weight=neg_weight, beta=beta)


def _kernel_multi(labels_ref, pred_ref, target_ref, out_ref, acc_ref, *,
                  feat_total, alpha, pos_weight, neg_weight, beta):
    k = pl.program_id(0)

    @pl.when(k == 0)
    def _():
        acc_ref[...] = jnp.zeros_like(acc_ref)

    # Lane-dense elementwise accumulation (pure VALU, no per-step XLU reduce,
    # no masked narrow stores).
    diff = pred_ref[...].astype(jnp.float32) - target_ref[...].astype(jnp.float32)
    acc_ref[...] += diff * diff

    @pl.when(k == pl.num_programs(0) - 1)
    def _():
        # Single cross-lane reduction + tiny softplus epilogue.
        loss = jnp.sum(acc_ref[...], axis=1, keepdims=True) * (1.0 / feat_total)
        _epilogue(loss, labels_ref[...], out_ref, alpha=alpha,
                  pos_weight=pos_weight, neg_weight=neg_weight, beta=beta)


def _pick_feat_tile(feat_total, B, in_itemsize, vmem_budget_bytes):
    """Largest legal feature tile that fits the VMEM budget.

    Budget model: 2 inputs x 2 pipeline buffers x in_itemsize per element plus
    4 bytes/element for the f32 accumulator scratch (only present in the
    multi-step path; counting it here is just conservative).
    """
    bytes_per_feat = B * (4 * in_itemsize + 4)
    max_tile = max(vmem_budget_bytes // max(bytes_per_feat, 1), 128)
    if feat_total <= max_tile:
        return feat_total                       # single full-width block
    t = (min(max_tile, feat_total) // 128) * 128
    while t >= 128:
        if feat_total % t == 0:                 # must divide F, multiple of 128
            return t
        t -= 128
    return feat_total                           # fallback: correctness over tiling


def custom_loss(pred, target, labels, *, alpha=20.0, pos_weight=1.0,
                neg_weight=1.0, beta=2.0,
                vmem_budget_bytes=24 * 1024 * 1024):
    B = pred.shape[0]
    feat_total = 1
    for d in pred.shape[1:]:
        feat_total *= d

    # Flatten only (no dtype cast in the wrapper -> no extra HBM round trip).
    pred2 = pred.reshape(B, feat_total)
    target2 = target.reshape(B, feat_total)
    labels2 = labels.astype(jnp.int32).reshape(B, 1)

    p_item = jnp.dtype(pred2.dtype).itemsize
    t_item = jnp.dtype(target2.dtype).itemsize
    in_itemsize = max(p_item, t_item)

    feat_tile = _pick_feat_tile(feat_total, B, in_itemsize, vmem_budget_bytes)
    n_tiles = feat_total // feat_tile
    assert n_tiles * feat_tile == feat_total

    static = dict(feat_total=float(feat_total), alpha=float(alpha),
                  pos_weight=float(pos_weight), neg_weight=float(neg_weight),
                  beta=float(beta))

    if n_tiles == 1:
        kernel = functools.partial(_kernel_single, **static)
        scratch_shapes = []
        acc_bytes = 0
    else:
        kernel = functools.partial(_kernel_multi, **static)
        scratch_shapes = [pltpu.VMEM((B, feat_tile), jnp.float32)]
        acc_bytes = B * feat_tile * 4

    # Explicit scoped-VMEM sizing (double-buffered inputs + accumulator),
    # clamped well under v7x's 64 MiB physical VMEM.
    block_in_bytes = 2 * B * feat_tile * (p_item + t_item)
    needed = block_in_bytes + acc_bytes + 2 * B * 4 + 1024
    vmem_limit = int(min(max(needed + (4 << 20), 16 << 20), 48 << 20))

    cost = pl.CostEstimate(
        flops=3 * B * feat_total + 8 * B,
        transcendentals=2 * B,
        bytes_accessed=B * feat_total * (p_item + t_item) + B * 4 + 4,
    )

    out = pl.pallas_call(
        kernel,
        out_shape=jax.ShapeDtypeStruct((1, 1), jnp.float32),
        grid_spec=pltpu.PrefetchScalarGridSpec(
            num_scalar_prefetch=0,
            grid=(n_tiles,),
            in_specs=[
                pl.BlockSpec((B, 1), lambda k: (0, 0)),          # labels
                pl.BlockSpec((B, feat_tile), lambda k: (0, k)),  # pred
                pl.BlockSpec((B, feat_tile), lambda k: (0, k)),  # target
            ],
            out_specs=pl.BlockSpec((1, 1), lambda k: (0, 0)),
            scratch_shapes=scratch_shapes,
        ),
        compiler_params=pltpu.CompilerParams(
            dimension_semantics=("arbitrary",),
            vmem_limit_bytes=vmem_limit,
        ),
        cost_estimate=cost,
    )(labels2, pred2, target2)
    return out[0, 0]


def _custom_loss_ref(pred, target, labels, *, alpha=20.0, pos_weight=1.0,
                     neg_weight=1.0, beta=2.0):
    B = pred.shape[0]
    p = pred.astype(jnp.float32)
    t = target.astype(jnp.float32)
    loss = ((p - t) ** 2).reshape(B, -1).mean(axis=1)
    pos_mask = (labels == 1).astype(jnp.float32)
    neg_mask = (labels == 0).astype(jnp.float32)
    weighted = beta * pos_weight * pos_mask * loss - neg_weight * neg_mask * loss
    return _softplus_torch(alpha * weighted).mean()


if __name__ == "__main__":
    key = jax.random.PRNGKey(0)
    k1, k2, k3 = jax.random.split(key, 3)

    # Small shapes consistent with the module (B, C, H, W); F = 3*16*16 = 768.
    batch_size, channels, height, width = 8, 3, 16, 16
    pred = jax.random.normal(k1, (batch_size, channels, height, width), jnp.float32)
    target = jax.random.normal(k2, (batch_size, channels, height, width), jnp.float32)
    labels = jax.random.randint(k3, (batch_size,), 0, 2)

    ref = _custom_loss_ref(pred, target, labels,
                           alpha=20.0, pos_weight=1.0, neg_weight=1.0, beta=2.0)

    # Single-block path (default VMEM budget -> whole F in one tile).
    out = custom_loss(pred, target, labels,
                      alpha=20.0, pos_weight=1.0, neg_weight=1.0, beta=2.0)
    out = jax.block_until_ready(out)
    assert jnp.allclose(out, ref, rtol=1e-5, atol=1e-5), (out, ref)

    # Multi-tile (accumulator) path: tiny VMEM budget forces feature tiling.
    out_tiled = custom_loss(pred, target, labels, alpha=20.0, pos_weight=1.0,
                            neg_weight=1.0, beta=2.0,
                            vmem_budget_bytes=48 * 1024)
    out_tiled = jax.block_until_ready(out_tiled)
    assert jnp.allclose(out_tiled, ref, rtol=1e-5, atol=1e-5), (out_tiled, ref)

    print("KERNEL_OK")
</pallas_src>

<mosaic_0001>
module attributes {stable_mosaic.version = 11 : i64} {
  func.func @_kernel_single(%arg0: i32, %arg1: memref<8x1xi32, #tpu.memory_space<vmem>>, %arg2: memref<8x768xf32, #tpu.memory_space<vmem>>, %arg3: memref<8x768xf32, #tpu.memory_space<vmem>>, %arg4: memref<1x1xf32, #tpu.memory_space<vmem>>) attributes {dimension_semantics = [#tpu.dimension_semantics<arbitrary>], iteration_bounds = array<i64: 1>, scalar_prefetch = 0 : i64, scratch_operands = 0 : i64, tpu.core_type = #tpu.core_type<tc>, window_params = [{pipeline_mode = #tpu.pipeline_mode<synchronous>, transform_indices = @transform_0, window_bounds = array<i64: 8, 1>}, {transform_indices = @transform_1, window_bounds = array<i64: 8, 768>}, {transform_indices = @transform_2, window_bounds = array<i64: 8, 768>}, {pipeline_mode = #tpu.pipeline_mode<synchronous>, transform_indices = @transform_3, window_bounds = array<i64: 1, 1>}]} {
    %c0 = arith.constant 0 : index
    %c0_0 = arith.constant 0 : index
    %0 = vector.load %arg2[%c0, %c0_0] : memref<8x768xf32, #tpu.memory_space<vmem>>, vector<8x768xf32>
    %c0_1 = arith.constant 0 : index
    %c0_2 = arith.constant 0 : index
    %1 = vector.load %arg3[%c0_1, %c0_2] : memref<8x768xf32, #tpu.memory_space<vmem>>, vector<8x768xf32>
    %2 = arith.subf %0, %1 : vector<8x768xf32>
    %3 = arith.mulf %2, %2 : vector<8x768xf32>
    %cst = arith.constant dense<0.000000e+00> : vector<8xf32>
    %4 = vector.multi_reduction <add>, %3, %cst [1] : vector<8x768xf32> to vector<8xf32>
    %5 = vector.shape_cast %4 : vector<8xf32> to vector<8x1xf32>
    %cst_3 = arith.constant 0.00130208337 : f32
    %6 = vector.broadcast %cst_3 : f32 to vector<8x1xf32>
    %7 = arith.mulf %5, %6 : vector<8x1xf32>
    %c0_4 = arith.constant 0 : index
    %c0_5 = arith.constant 0 : index
    %8 = vector.load %arg1[%c0_4, %c0_5] : memref<8x1xi32, #tpu.memory_space<vmem>>, vector<8x1xi32>
    %c1_i32 = arith.constant 1 : i32
    %9 = vector.broadcast %c1_i32 : i32 to vector<8x1xi32>
    %10 = arith.cmpi eq, %8, %9 : vector<8x1xi32>
    %11 = arith.extui %10 : vector<8x1xi1> to vector<8x1xi32>
    %12 = arith.sitofp %11 : vector<8x1xi32> to vector<8x1xf32>
    %c0_i32 = arith.constant 0 : i32
    %13 = vector.broadcast %c0_i32 : i32 to vector<8x1xi32>
    %14 = arith.cmpi eq, %8, %13 : vector<8x1xi32>
    %15 = arith.extui %14 : vector<8x1xi1> to vector<8x1xi32>
    %16 = arith.sitofp %15 : vector<8x1xi32> to vector<8x1xf32>
    %cst_6 = arith.constant 2.000000e+00 : f32
    %17 = vector.broadcast %cst_6 : f32 to vector<8x1xf32>
    %18 = arith.mulf %17, %12 : vector<8x1xf32>
    %cst_7 = arith.constant 1.000000e+00 : f32
    %19 = vector.broadcast %cst_7 : f32 to vector<8x1xf32>
    %20 = arith.mulf %19, %16 : vector<8x1xf32>
    %21 = arith.subf %18, %20 : vector<8x1xf32>
    %22 = arith.mulf %21, %7 : vector<8x1xf32>
    %cst_8 = arith.constant 2.000000e+01 : f32
    %23 = vector.broadcast %cst_8 : f32 to vector<8x1xf32>
    %24 = arith.mulf %23, %22 : vector<8x1xf32>
    %cst_9 = arith.constant 2.000000e+01 : f32
    %25 = vector.broadcast %cst_9 : f32 to vector<8x1xf32>
    %26 = arith.minimumf %24, %25 : vector<8x1xf32>
    %cst_10 = arith.constant 2.000000e+01 : f32
    %27 = vector.broadcast %cst_10 : f32 to vector<8x1xf32>
    %28 = arith.cmpf ogt, %24, %27 : vector<8x1xf32>
    %29 = math.exp %26 : vector<8x1xf32>
    %30 = math.log1p %29 : vector<8x1xf32>
    %31 = arith.select %28, %24, %30 : vector<8x1xi1>, vector<8x1xf32>
    %32 = vector.shape_cast %31 : vector<8x1xf32> to vector<1x8x1xf32>
    %cst_11 = arith.constant dense<0.000000e+00> : vector<1xf32>
    %33 = vector.multi_reduction <add>, %32, %cst_11 [1, 2] : vector<1x8x1xf32> to vector<1xf32>
    %34 = vector.shape_cast %33 : vector<1xf32> to vector<1x1x1xf32>
    %35 = vector.extract %34[0, 0, 0] : f32 from vector<1x1x1xf32>
    %cst_12 = arith.constant 8.000000e+00 : f32
    %36 = arith.divf %35, %cst_12 : f32
    %37 = vector.broadcast %36 : f32 to vector<1x1xf32>
    %c0_13 = arith.constant 0 : index
    %c0_14 = arith.constant 0 : index
    %38 = vector.load %arg4[%c0_13, %c0_14] : memref<1x1xf32, #tpu.memory_space<vmem>>, vector<1x1xf32>
    tpu.vector_store %arg4[%c0_13, %c0_14], %37 {strides = array<i32>} : memref<1x1xf32, #tpu.memory_space<vmem>>, vector<1x1xf32>,
    return
  }
  func.func @transform_0(%arg0: i32) -> (i32, i32) {
    %c0_i32 = arith.constant 0 : i32
    %c0_i32_0 = arith.constant 0 : i32
    %c0_i32_1 = arith.constant 0 : i32
    return %c0_i32, %c0_i32_0 : i32, i32
  }
  func.func @transform_1(%arg0: i32) -> (i32, i32) {
    %c0_i32 = arith.constant 0 : i32
    %c0_i32_0 = arith.constant 0 : i32
    return %c0_i32, %arg0 : i32, i32
  }
  func.func @transform_2(%arg0: i32) -> (i32, i32) {
    %c0_i32 = arith.constant 0 : i32
    %c0_i32_0 = arith.constant 0 : i32
    return %c0_i32, %arg0 : i32, i32
  }
  func.func @transform_3(%arg0: i32) -> (i32, i32) {
    %c0_i32 = arith.constant 0 : i32
    %c0_i32_0 = arith.constant 0 : i32
    %c0_i32_1 = arith.constant 0 : i32
    return %c0_i32, %c0_i32_0 : i32, i32
  }
}

</mosaic_0001>

<llo_original>
// kernel: tpu_custom_call.1
$region0: #{tpu_custom_call.1}
  #allocation0 [shape = 'u32[]', space=smem, size = 0x4, offset = 0x4, fixed_abs, tag = 'smem constant byte address 0x4 - core index']
  #allocation1 [shape = 'u32[144,128]{1,0:T(1,128)}', space=vmem, size = 0x12000, scoped, tag = 'internal scratch']
  %s0 = inlined_call_operand.vmem [shape: s32[8,1], index: 0, kind: input, shape index: {}]
  %s1 = inlined_call_operand.hbm [shape: f32[8,768], index: 1, kind: input, shape index: {}]
  %s2 = inlined_call_operand.hbm [shape: f32[8,768], index: 2, kind: input, shape index: {}]
  %s3 = inlined_call_operand.hbm [shape: f32[1,1], index: 3, kind: output, shape index: {}]
  %s4 = sld [smem:[#allocation0]]
  $region30: #{tpu_custom_call.1} parent=0
    _
  %s6 = ssub.s32 1, %s4
  %s7 = scalar_select 0, %s6, %s4
  $region1: #{tpu_custom_call.1} parent=0
    #allocation2 [shape = 'u8[24576]{0}', space=vmem, size = 0x6000, scoped, tag = 'input window, operand 1, single buffered']
    #allocation3 [shape = 's32[1]{0}', space=sflag, size = 0x4, scoped, tag = 'scoped memory for tpu_custom_call.1']
    #allocation4 [shape = 's32[1]{0}', space=sflag, size = 0x4, scoped, tag = 'scoped memory for tpu_custom_call.1']
    #allocation5 [shape = 'u8[24576]{0}', space=vmem, size = 0x6000, scoped, tag = 'input window, operand 2, single buffered']
    #allocation6 [shape = 's32[1]{0}', space=sflag, size = 0x4, scoped, tag = 'scoped memory for tpu_custom_call.1']
    #allocation7 [shape = 'u8[512]{0}', space=vmem, size = 0x400, scoped, tag = 'output window, operand 0, single buffered']
    %8 = vsyncpa [#allocation3], 0
    %9 = vsyncpa [#allocation6], 0
    %10 = vsyncpa [#allocation4], 0
    // Predicated region
    $region2: #{tpu_custom_call.1} parent=1 // pred_check
      _
    $region3: #{tpu_custom_call.1} parent=1 // pred_check_branch
      %12 = sbr.rel (0) target = $region5
    $region4: #{tpu_custom_call.1} parent=1 // pred_region
      _
    $region5: #{tpu_custom_call.1} parent=1 // pred_fallthru
      _
    // Predicated region
    $region6: #{tpu_custom_call.1} parent=1 // pred_check
      _
    $region7: #{tpu_custom_call.1} parent=1 // pred_check_branch
      %14 = sbr.rel (0) target = $region9
    $region8: #{tpu_custom_call.1} parent=1 // pred_region
      %s16 = ssub.s32 768, 768
      %17 = vsyncadd [#allocation3], %s16
      %s19 = sshll.u32 [#allocation2], 4
      %s20 = int_to_ptr.vmem [resolvable:$true] %s19
      %22 = dma.hbm_to_vmem [thread:$0]  %s1, 768, %s20, [#allocation3]
    $region9: #{tpu_custom_call.1} parent=1 // pred_fallthru
      _
    // Predicated region
    $region10: #{tpu_custom_call.1} parent=1 // pred_check
      _
    $region11: #{tpu_custom_call.1} parent=1 // pred_check_branch
      %24 = sbr.rel (0) target = $region13
    $region12: #{tpu_custom_call.1} parent=1 // pred_region
      %s26 = ssub.s32 768, 768
      %27 = vsyncadd [#allocation6], %s26
      %s29 = sshll.u32 [#allocation5], 4
      %s30 = int_to_ptr.vmem [resolvable:$true] %s29
      %32 = dma.hbm_to_vmem [thread:$0]  %s2, 768, %s30, [#allocation6]
    $region13: #{tpu_custom_call.1} parent=1 // pred_fallthru
      _
    // Predicated region
    $region14: #{tpu_custom_call.1} parent=1 // pred_check
      _
    $region15: #{tpu_custom_call.1} parent=1 // pred_check_branch
      %34 = sbr.rel (0) target = $region17
    $region16: #{tpu_custom_call.1} parent=1 // pred_region
      %35 = dma.done [#allocation3], 768
    $region17: #{tpu_custom_call.1} parent=1 // pred_fallthru
      _
    // Predicated region
    $region18: #{tpu_custom_call.1} parent=1 // pred_check
      _
    $region19: #{tpu_custom_call.1} parent=1 // pred_check_branch
      %37 = sbr.rel (0) target = $region21
    $region20: #{tpu_custom_call.1} parent=1 // pred_region
      %38 = dma.done [#allocation6], 768
    $region21: #{tpu_custom_call.1} parent=1 // pred_fallthru
      _
    %v39 = vld [vmem:[#allocation2] sm:$0xff]
    %v40 = vld [vmem:[#allocation2 + $0x8] sm:$0xff]
    %v41 = vld [vmem:[#allocation2 + $0x10] sm:$0xff]
    %v42 = vld [vmem:[#allocation2 + $0x18] sm:$0xff]
    %v43 = vld [vmem:[#allocation2 + $0x20] sm:$0xff]
    %v44 = vld [vmem:[#allocation2 + $0x28] sm:$0xff]
    %v45 = vld [vmem:[#allocation5] sm:$0xff]
    %v46 = vld [vmem:[#allocation5 + $0x8] sm:$0xff]
    %v47 = vld [vmem:[#allocation5 + $0x10] sm:$0xff]
    %v48 = vld [vmem:[#allocation5 + $0x18] sm:$0xff]
    %v49 = vld [vmem:[#allocation5 + $0x20] sm:$0xff]
    %v50 = vld [vmem:[#allocation5 + $0x28] sm:$0xff]
    %v51 = vsub.f32 %v39, %v45
    %v52 = vsub.f32 %v40, %v46
    %v53 = vsub.f32 %v41, %v47
    %v54 = vsub.f32 %v42, %v48
    %v55 = vsub.f32 %v43, %v49
    %v56 = vsub.f32 %v44, %v50
    %v57 = vmul.f32 %v51, %v51
    %v58 = vmul.f32 %v52, %v52
    %v59 = vmul.f32 %v53, %v53
    %v60 = vmul.f32 %v54, %v54
    %v61 = vmul.f32 %v55, %v55
    %v62 = vmul.f32 %v56, %v56
    %v63 = vadd.f32 %v57, %v58
    %v64 = vadd.f32 %v63, %v59
    %v65 = vadd.f32 %v64, %v60
    %v66 = vadd.f32 %v65, %v61
    %v67 = vadd.f32 %v66, %v62
    %68 = vadd.xlane.f32.xlu0 %v67
    %v69 = vpop.xlane.xlu0 %68
    %v70 = vmul.f32 %v69, 0.0013020834
    %v71 = vld [vmem:[%s0] sm:$0xff]
    %vm72 = vcmp.eq.s32.totalorder %v71, 1
    %v73 = vsel %vm72, 1, 0
    %v74 = vcvt.s32.f32 %v73
    %vm75 = vcmp.eq.s32.totalorder %v71, 0
    %v76 = vsel %vm75, 1, 0
    %v77 = vcvt.s32.f32 %v76
    %v78 = vmul.f32 %v74, 2.0
    %v79 = vsub.f32 %v78, %v77
    %v80 = vmul.f32 %v79, %v70
    %v81 = vmul.f32 %v80, 20.0
    %v82 = vmin.f32 %v81, 20.0
    %vm83 = vcmp.gt.f32.partialorder %v81, 20.0
    %v84 = vmul.f32 %v82, 1.442695
    %v85 = vpow.pop %v84
    %v86 = vadd.f32 %v85, 1.0
    %v87 = vlog2.pop %v86
    %v88 = vmul.f32 %v87, 0.6931472
    %v89 = vmul.f32 -0.5, %v85
    %v90 = vadd.f32 %v89, 1.0
    %v91 = vmul.f32 %v90, %v85
    %v92 = vand.u32 2147483647, %v85
    %vm93 = vcmp.lt.f32.partialorder %v92, 0.0004427343
    %v94 = vsel %vm93, %v91, %v88
    %v95 = vsel %vm83, %v81, %v94
    %vm96 = vcmask 7168
    %v97 = vsel %vm96, %v95, 0.0
    %98 = vadd.xlane.f32.xlu0 %v97
    %v99 = vpop.xlane.xlu0 %98
    %v100 = vrot.slane %v99, 4
    %v101 = vadd.f32 %v99, %v100
    %v102 = vrot.slane %v101, 2
    %v103 = vadd.f32 %v101, %v102
    %v104 = vrot.slane %v103, 1
    %v105 = vadd.f32 %v103, %v104
    %s106 = vtos %v105
    %v107 = vrcp.pop 8.0
    %s108 = vtos %v107
    %s109 = smul.f32 %s106, %s108
    %v110 = vstv %s109
    %vm111 = vcmask 0
    %112 = vst.msk [vmem:[#allocation7] sm:$0x1] %vm111, %v110
    // Predicated region
    $region22: #{tpu_custom_call.1} parent=1 // pred_check
      _
    $region23: #{tpu_custom_call.1} parent=1 // pred_check_branch
      %114 = sbr.rel (0) target = $region25
    $region24: #{tpu_custom_call.1} parent=1 // pred_region
      %s116 = ssub.s32 16, 16
      %117 = vsyncadd [#allocation4], %s116
      %s119 = sshll.u32 [#allocation7], 4
      %s120 = int_to_ptr.vmem [resolvable:$true] %s119
      %122 = dma.vmem_to_hbm [thread:$0]  %s120, 16, %s3, [#allocation4]
    $region25: #{tpu_custom_call.1} parent=1 // pred_fallthru
      _
    // Predicated region
    $region26: #{tpu_custom_call.1} parent=1 // pred_check
      _
    $region27: #{tpu_custom_call.1} parent=1 // pred_check_branch
      %124 = sbr.rel (0) target = $region29
    $region28: #{tpu_custom_call.1} parent=1 // pred_region
      %125 = dma.done [#allocation4], 16
    $region29: #{tpu_custom_call.1} parent=1 // pred_fallthru
      _
    %126 = vsyncpa [#allocation3], 1
    %127 = vsyncpa [#allocation6], 1
    %128 = vsyncpa [#allocation4], 1

</llo_original>
